<compile_context>
chip_gen: v7x
topology: tpu7x:2x2x1
jax: 0.10.0
libtpu: 0.0.40
codegen_flags: <defaults>
</compile_context>

<pallas_src>
import functools

import jax
import jax.numpy as jnp
from jax import lax
from jax.experimental import pallas as pl
from jax.experimental.pallas import tpu as pltpu


def _conv3x3_relu_kernel(x_ref, w_ref, b_ref, o_ref, pad_ref, *, mxu_dtype):
    # x_ref:   (Nb, H, W*Cin)        Nb images, channels-fastest rows
    # w_ref:   (3*W*Cin, W*Cout)     banded weight matrix (mxu_dtype)
    # b_ref:   (1, W*Cout)           bias replicated along W (f32)
    # o_ref:   (Nb, H, W*Cout)       lane-dense output rows
    # pad_ref: (Nb, H+32, W*Cin)     per-image zero-halo staging (mxu_dtype)
    nb, H, WCin = x_ref.shape
    WCout = o_ref.shape[2]
    OFF = 16  # image rows at [OFF, OFF+H): 16-aligned for bf16 sublane packing

    # Only rows OFF-1 and OFF+H are read outside the interior, so zero just
    # those (2 tiny row stores per step instead of a full-buffer zero pass).
    # Done every step rather than under pl.when(program_id==0): with
    # "parallel" megacore sharding the second TensorCore never runs step 0,
    # so its private scratch halos would otherwise stay uninitialized.
    zero_row = jnp.zeros((nb, 1, WCin), mxu_dtype)
    pad_ref[:, pl.ds(OFF - 1, 1), :] = zero_row
    pad_ref[:, pl.ds(OFF + H, 1), :] = zero_row

    # Stage this step's images in the MXU dtype (bf16): halves staging traffic
    # vs f32; the store covers exactly the aligned 16-row packed tile(s).
    pad_ref[:, pl.ds(OFF, H), :] = x_ref[...].astype(mxu_dtype)

    sv = pad_ref[:, OFF - 1:OFF + H + 1, :]   # rows [OFF-1, OFF+H] only
    up = sv[:, 0:H, :]          # row h -> x[h-1]  (zero halo at h = 0)
    mid = sv[:, 1:H + 1, :]     # row h -> x[h]
    down = sv[:, 2:H + 2, :]    # row h -> x[h+1]  (zero halo at h = H-1)

    # One MXU matmul for all Nb images this step:
    #   (Nb*H, 3*W*Cin) @ (3*W*Cin, W*Cout)
    # The leading-dim reshape is layout-free; the banded weight folds the dx
    # taps, so the result lands directly in the lane-dense (.., W*Cout) layout.
    lhs = jnp.concatenate([up, mid, down], axis=2).reshape(nb * H, 3 * WCin)
    acc = jnp.dot(lhs, w_ref[...], preferred_element_type=jnp.float32)

    acc = jnp.maximum(acc + b_ref[...], 0.0)        # bias + ReLU, f32 epilogue
    o_ref[...] = acc.reshape(nb, H, WCout).astype(o_ref.dtype)


def _images_per_step(N, H, target_rows=256, min_rows=128):
    """Images per grid step: fill the MXU M dim, keep >=2 steps when possible."""
    nb = 1
    for cand in range(1, N + 1):
        if N % cand == 0 and cand * H <= target_rows:
            nb = cand
    # Prefer >= 2 grid steps (v7x has 2 TensorCores + pipelining) as long as
    # the matmul M dimension stays >= min_rows.
    if N // nb < 2 and nb % 2 == 0 and (nb // 2) * H >= min_rows:
        nb //= 2
    return nb


def conv_relu(x_nchw, w_oihw, b, *, mxu_dtype=jnp.bfloat16):
    """ConvRelu forward: Conv2d(Cin, Cout, 3, padding=1) + ReLU.  NCHW in/out."""
    N, Cin, H, W = x_nchw.shape
    Cout = w_oihw.shape[0]
    nb = _images_per_step(N, H)

    # NCHW -> NHWC -> lane-dense rows (N, H, W*Cin).  Only the transpose moves
    # data; at production scale accept channels-last input (or fuse it) -- at
    # demo size it is noise.
    x_rows = jnp.transpose(x_nchw, (0, 2, 3, 1)).reshape(N, H, W * Cin)

    # Banded weight: rhs[(dy*W + j)*Cin + ci, w*Cout + co]
    #                  = weight[co, ci, dy, j - w + 1]  if 0 <= j-w+1 < 3 else 0.
    # Out-of-range dx taps would multiply the zero padding anyway, so dropping
    # them keeps the math exact.
    w_hwio = jnp.transpose(w_oihw, (2, 3, 1, 0))                  # (3, 3, Cin, Cout)
    jj = jnp.arange(W)
    ww = jnp.arange(W)
    dx = jnp.arange(3)
    band = (jj[None, :, None] == (ww[None, None, :] + dx[:, None, None] - 1))
    band = band.astype(w_hwio.dtype)                              # (3, W, W)
    rhs = jnp.einsum("xjw,yxio->yjiwo", band, w_hwio)             # (3, W, Cin, W, Cout)
    rhs = rhs.reshape(3 * W * Cin, W * Cout).astype(mxu_dtype)

    # Bias replicated along W so it broadcasts over the lane-dense output rows.
    b_lane = jnp.tile(b.astype(jnp.float32)[None, :], (1, W))     # (1, W*Cout)

    kernel = functools.partial(_conv3x3_relu_kernel, mxu_dtype=mxu_dtype)
    out_rows = pl.pallas_call(
        kernel,
        out_shape=jax.ShapeDtypeStruct((N, H, W * Cout), x_nchw.dtype),
        grid=(N // nb,),
        in_specs=[
            pl.BlockSpec((nb, H, W * Cin), lambda n: (n, 0, 0)),
            # Resident operands: constant index_map -> fetched once.
            pl.BlockSpec((3 * W * Cin, W * Cout), lambda n: (0, 0)),
            pl.BlockSpec((1, W * Cout), lambda n: (0, 0)),
        ],
        out_specs=pl.BlockSpec((nb, H, W * Cout), lambda n: (n, 0, 0)),
        scratch_shapes=[pltpu.VMEM((nb, H + 32, W * Cin), mxu_dtype)],
        compiler_params=pltpu.CompilerParams(
            dimension_semantics=("parallel",),   # shard image tiles across TCs
            vmem_limit_bytes=32 * 1024 * 1024,
        ),
    )(x_rows, rhs, b_lane)

    # (N, H, W*Cout) -> (N, H, W, Cout) -> NCHW.  The reshape is free.
    return jnp.transpose(out_rows.reshape(N, H, W, Cout), (0, 3, 1, 2))


def reference_conv_relu(x_nchw, w_oihw, b):
    """Pure-lax NCHW reference (true f32) for verification."""
    dn = ("NCHW", "OIHW", "NCHW")
    y = lax.conv_general_dilated(x_nchw, w_oihw, (1, 1), ((1, 1), (1, 1)),
                                 dimension_numbers=dn,
                                 precision=lax.Precision.HIGHEST)
    return jnp.maximum(y + b[None, :, None, None], 0.0)


if __name__ == "__main__":
    # Small ConvRelu: batch=2, in_channels=4, out_channels=8, spatial 16x16.
    # (W * Cout = 128 -> each output row is exactly one vreg lane width;
    #  both images are processed in a single grid step: matmul M = 32.)
    N, Cin, Cout, H, W = 2, 4, 8, 16, 16

    key = jax.random.PRNGKey(0)
    k_x, k_w, k_b = jax.random.split(key, 3)
    x = jax.random.normal(k_x, (N, Cin, H, W), jnp.float32)
    w = 0.1 * jax.random.normal(k_w, (Cout, Cin, 3, 3), jnp.float32)   # PyTorch OIHW
    b = 0.1 * jax.random.normal(k_b, (Cout,), jnp.float32)

    fwd = jax.jit(functools.partial(conv_relu, mxu_dtype=jnp.bfloat16))
    out = jax.block_until_ready(fwd(x, w, b))
    assert out.shape == (N, Cout, H, W), out.shape

    # 1) End-to-end check vs the true-f32 reference (loose tol for bf16 MXU inputs).
    ref = jax.block_until_ready(reference_conv_relu(x, w, b))
    if not bool(jnp.allclose(out, ref, atol=3e-2, rtol=3e-2)):
        raise AssertionError("Pallas ConvRelu does not match f32 lax reference")

    # 2) Tight structural check: same bf16-rounded operands, f32 accumulation.
    ref_tight = jax.block_until_ready(reference_conv_relu(
        x.astype(jnp.bfloat16).astype(jnp.float32),
        w.astype(jnp.bfloat16).astype(jnp.float32), b))
    if not bool(jnp.allclose(out, ref_tight, atol=1e-3, rtol=1e-3)):
        raise AssertionError("Pallas ConvRelu does not match bf16-rounded reference")

    print("KERNEL_OK")
</pallas_src>

<mosaic_0001>
module attributes {stable_mosaic.version = 11 : i64} {
  func.func @_conv3x3_relu_kernel(%arg0: i32, %arg1: memref<2x16x64xf32, #tpu.memory_space<vmem>>, %arg2: memref<192x128xbf16, #tpu.memory_space<vmem>>, %arg3: memref<1x128xf32, #tpu.memory_space<vmem>>, %arg4: memref<2x16x128xf32, #tpu.memory_space<vmem>>, %arg5: memref<2x48x64xbf16, #tpu.memory_space<vmem>>) attributes {dimension_semantics = [#tpu.dimension_semantics<parallel>], iteration_bounds = array<i64: 1>, scalar_prefetch = 0 : i64, scratch_operands = 1 : i64, tpu.core_type = #tpu.core_type<tc>, window_params = [{transform_indices = @transform_0, window_bounds = array<i64: 2, 16, 64>}, {pipeline_mode = #tpu.pipeline_mode<synchronous>, transform_indices = @transform_1, window_bounds = array<i64: 192, 128>}, {pipeline_mode = #tpu.pipeline_mode<synchronous>, transform_indices = @transform_2, window_bounds = array<i64: 1, 128>}, {transform_indices = @transform_3, window_bounds = array<i64: 2, 16, 128>}]} {
    %cst = arith.constant 0.000000e+00 : bf16
    %0 = vector.broadcast %cst : bf16 to vector<2x1x64xbf16>
    %c0 = arith.constant 0 : index
    %c15 = arith.constant 15 : index
    %c0_0 = arith.constant 0 : index
    %1 = vector.load %arg5[%c0, %c15, %c0_0] : memref<2x48x64xbf16, #tpu.memory_space<vmem>>, vector<2x1x64xbf16>
    tpu.vector_store %arg5[%c0, %c15, %c0_0], %0 {strides = array<i32>} : memref<2x48x64xbf16, #tpu.memory_space<vmem>>, vector<2x1x64xbf16>,
    %c0_1 = arith.constant 0 : index
    %c32 = arith.constant 32 : index
    %c0_2 = arith.constant 0 : index
    %2 = vector.load %arg5[%c0_1, %c32, %c0_2] : memref<2x48x64xbf16, #tpu.memory_space<vmem>>, vector<2x1x64xbf16>
    tpu.vector_store %arg5[%c0_1, %c32, %c0_2], %0 {strides = array<i32>} : memref<2x48x64xbf16, #tpu.memory_space<vmem>>, vector<2x1x64xbf16>,
    %c0_3 = arith.constant 0 : index
    %c0_4 = arith.constant 0 : index
    %c0_5 = arith.constant 0 : index
    %3 = vector.load %arg1[%c0_3, %c0_4, %c0_5] : memref<2x16x64xf32, #tpu.memory_space<vmem>>, vector<2x16x64xf32>
    %4 = arith.truncf %3 : vector<2x16x64xf32> to vector<2x16x64xbf16>
    %c0_6 = arith.constant 0 : index
    %c16 = arith.constant 16 : index
    %c0_7 = arith.constant 0 : index
    %5 = vector.load %arg5[%c0_6, %c16, %c0_7] : memref<2x48x64xbf16, #tpu.memory_space<vmem>>, vector<2x16x64xbf16>
    tpu.vector_store %arg5[%c0_6, %c16, %c0_7], %4 {strides = array<i32>} : memref<2x48x64xbf16, #tpu.memory_space<vmem>>, vector<2x16x64xbf16>,
    %c0_8 = arith.constant 0 : index
    %c15_9 = arith.constant 15 : index
    %c0_10 = arith.constant 0 : index
    %6 = vector.load %arg5[%c0_8, %c15_9, %c0_10] : memref<2x48x64xbf16, #tpu.memory_space<vmem>>, vector<2x18x64xbf16>
    %7 = vector.extract_strided_slice %6 {offsets = [0, 0, 0], sizes = [2, 16, 64], strides = [1, 1, 1]} : vector<2x18x64xbf16> to vector<2x16x64xbf16>
    %8 = vector.extract_strided_slice %6 {offsets = [0, 1, 0], sizes = [2, 16, 64], strides = [1, 1, 1]} : vector<2x18x64xbf16> to vector<2x16x64xbf16>
    %9 = vector.extract_strided_slice %6 {offsets = [0, 2, 0], sizes = [2, 16, 64], strides = [1, 1, 1]} : vector<2x18x64xbf16> to vector<2x16x64xbf16>
    %10 = tpu.concatenate %7, %8, %9 in 2 : vector<2x16x64xbf16>, vector<2x16x64xbf16>, vector<2x16x64xbf16> -> vector<2x16x192xbf16>
    %11 = vector.shape_cast %10 : vector<2x16x192xbf16> to vector<32x192xbf16>
    %c0_11 = arith.constant 0 : index
    %c0_12 = arith.constant 0 : index
    %12 = vector.load %arg2[%c0_11, %c0_12] : memref<192x128xbf16, #tpu.memory_space<vmem>>, vector<192x128xbf16>
    %cst_13 = arith.constant dense<0.000000e+00> : vector<32x128xf32>
    %13 = tpu.matmul %11, %12, %cst_13 {dimension_numbers = #tpu.dot_dimension_numbers<[1], [0], [0], [1], [0, 0, 1, 1], [], []>} : vector<32x192xbf16>, vector<192x128xbf16>, vector<32x128xf32> -> vector<32x128xf32>
    %c0_14 = arith.constant 0 : index
    %c0_15 = arith.constant 0 : index
    %14 = vector.load %arg3[%c0_14, %c0_15] : memref<1x128xf32, #tpu.memory_space<vmem>>, vector<1x128xf32>
    %15 = vector.broadcast %14 : vector<1x128xf32> to vector<32x128xf32>
    %16 = arith.addf %13, %15 : vector<32x128xf32>
    %cst_16 = arith.constant 0.000000e+00 : f32
    %17 = vector.broadcast %cst_16 : f32 to vector<32x128xf32>
    %18 = arith.maximumf %16, %17 : vector<32x128xf32>
    %19 = vector.shape_cast %18 : vector<32x128xf32> to vector<2x16x128xf32>
    %c0_17 = arith.constant 0 : index
    %c0_18 = arith.constant 0 : index
    %c0_19 = arith.constant 0 : index
    %20 = vector.load %arg4[%c0_17, %c0_18, %c0_19] : memref<2x16x128xf32, #tpu.memory_space<vmem>>, vector<2x16x128xf32>
    tpu.vector_store %arg4[%c0_17, %c0_18, %c0_19], %19 {strides = array<i32>} : memref<2x16x128xf32, #tpu.memory_space<vmem>>, vector<2x16x128xf32>,
    return
  }
  func.func @transform_0(%arg0: i32) -> (i32, i32, i32) {
    %c0_i32 = arith.constant 0 : i32
    %c0_i32_0 = arith.constant 0 : i32
    %c0_i32_1 = arith.constant 0 : i32
    return %arg0, %c0_i32, %c0_i32_0 : i32, i32, i32
  }
  func.func @transform_1(%arg0: i32) -> (i32, i32) {
    %c0_i32 = arith.constant 0 : i32
    %c0_i32_0 = arith.constant 0 : i32
    %c0_i32_1 = arith.constant 0 : i32
    return %c0_i32, %c0_i32_0 : i32, i32
  }
  func.func @transform_2(%arg0: i32) -> (i32, i32) {
    %c0_i32 = arith.constant 0 : i32
    %c0_i32_0 = arith.constant 0 : i32
    %c0_i32_1 = arith.constant 0 : i32
    return %c0_i32, %c0_i32_0 : i32, i32
  }
  func.func @transform_3(%arg0: i32) -> (i32, i32, i32) {
    %c0_i32 = arith.constant 0 : i32
    %c0_i32_0 = arith.constant 0 : i32
    %c0_i32_1 = arith.constant 0 : i32
    return %arg0, %c0_i32, %c0_i32_0 : i32, i32, i32
  }
}

</mosaic_0001>

<llo_original>
// kernel: conv_relu.1
$region0: #{conv_relu.1}
  #allocation0 [shape = 'u32[]', space=smem, size = 0x4, offset = 0x4, fixed_abs, tag = 'smem constant byte address 0x4 - core index']
  #allocation1 [shape = 'u32[144,128]{1,0:T(1,128)}', space=vmem, size = 0x12000, scoped, tag = 'internal scratch']
  #allocation2 [shape = 'bf16[2,48,64]{2,1,0:T(16,128)(2,1)}', space=vmem, size = 0x6000, scoped, tag = 'scratch operand']
  %s0 = inlined_call_operand.vmem [shape: f32[2,16,64], index: 0, kind: input, shape index: {}]
  %s1 = inlined_call_operand.vmem [shape: bf16[192,128], index: 1, kind: input, shape index: {}]
  %s2 = inlined_call_operand.vmem [shape: f32[1,128], index: 2, kind: input, shape index: {}]
  %s3 = inlined_call_operand.vmem [shape: f32[2,16,128], index: 3, kind: output, shape index: {}]
  %s4 = sld [smem:[#allocation0]]
  $region22: #{conv_relu.1} parent=0
    _
  %s6 = ssub.s32 1, %s4
  %s7 = scalar_select 0, %s6, %s4
  // Predicated region
  $region2: #{conv_relu.1} parent=0 // pred_check
    _
  $region3: #{conv_relu.1} parent=0 // pred_check_branch
    %9 = sbr.rel (0) target = $region5
  $region4: #{conv_relu.1} parent=0 // pred_region
    _
  $region5: #{conv_relu.1} parent=0 // pred_fallthru
    _
  // Predicated region
  $region6: #{conv_relu.1} parent=0 // pred_check
    _
  $region7: #{conv_relu.1} parent=0 // pred_check_branch
    %11 = sbr.rel (0) target = $region9
  $region8: #{conv_relu.1} parent=0 // pred_region
    _
  $region9: #{conv_relu.1} parent=0 // pred_fallthru
    _
  // Predicated region
  $region10: #{conv_relu.1} parent=0 // pred_check
    _
  $region11: #{conv_relu.1} parent=0 // pred_check_branch
    %13 = sbr.rel (0) target = $region13
  $region12: #{conv_relu.1} parent=0 // pred_region
    _
  $region13: #{conv_relu.1} parent=0 // pred_fallthru
    _
  %vm15 = vcmask 523271
  %vm16 = vsmask.f32 7966
  %vm17 = vmand %vm15, %vm16
  %v18 = vld [vmem:[#allocation2] sm:$0x80]
  %v19 = vsel %vm17, 0, %v18
  %20 = vst [vmem:[#allocation2] sm:$0x80] %v19
  %v21 = vld [vmem:[#allocation2 + $0x18] sm:$0x80]
  %v22 = vsel %vm17, 0, %v21
  %23 = vst [vmem:[#allocation2 + $0x18] sm:$0x80] %v22
  %vm24 = vcmask 516096
  %vm25 = vsmask.f32 256
  %vm26 = vmand %vm24, %vm25
  %v27 = vld [vmem:[#allocation2 + $0x10] sm:$0x1]
  %v28 = vsel %vm26, 0, %v27
  %29 = vst [vmem:[#allocation2 + $0x10] sm:$0x1] %v28
  %v30 = vld [vmem:[#allocation2 + $0x28] sm:$0x1]
  %v31 = vsel %vm26, 0, %v30
  %32 = vst [vmem:[#allocation2 + $0x28] sm:$0x1] %v31
  %v33 = vld [vmem:[%s0] sm:$0xff]
  %v34 = vld [vmem:[%s0 + $0x8] sm:$0xff]
  %v35 = vld [vmem:[%s0 + $0x10] sm:$0xff]
  %v36 = vld [vmem:[%s0 + $0x18] sm:$0xff]
  %v37 = vpack.c.bf16 %v34, %v33
  %v38 = vpack.c.bf16 %v36, %v35
  %vm39 = vcmask 523264
  %40 = vst.msk [vmem:[#allocation2 + $0x8] sm:$0xff] %vm39, %v37
  %41 = vst.msk [vmem:[#allocation2 + $0x20] sm:$0xff] %vm39, %v38
  %v42 = vld [vmem:[#allocation2] sm:$0x80]
  %v43 = vld [vmem:[#allocation2 + $0x8] sm:$0xff]
  %v44 = vld [vmem:[#allocation2 + $0x10] sm:$0x1]
  %v45 = vld [vmem:[#allocation2 + $0x18] sm:$0x80]
  %v46 = vld [vmem:[#allocation2 + $0x20] sm:$0xff]
  %v47 = vld [vmem:[#allocation2 + $0x28] sm:$0x1]
  %v49 = vshll.u32 %v43, 16
  %v51 = vrot.slane %v49, 1
  %v52 = vshrl.u32 %v43, 16
  %v54 = vor.u32 %v52, %v51
  %v56 = vshll.u32 %v46, 16
  %v58 = vrot.slane %v56, 1
  %v59 = vshrl.u32 %v46, 16
  %v61 = vor.u32 %v59, %v58
  %62 = vrot.lane.b32.xlu0 %v51, 64
  %v63 = vpop.permute.xlu0 %62
  %64 = vrot.lane.b32.xlu0 %v54, 64
  %v65 = vpop.permute.xlu0 %64
  %66 = vrot.lane.b32.xlu0 %v58, 64
  %v67 = vpop.permute.xlu0 %66
  %68 = vrot.lane.b32.xlu0 %v61, 64
  %v69 = vpop.permute.xlu0 %68
  %vm74 = vcmask 1046528
  %v75 = vrot.slane %v43, 1
  %v76 = vrot.slane %v44, 1
  %v77 = vsel %vm74, %v75, %v76
  %v78 = vrot.slane %v46, 1
  %v79 = vrot.slane %v47, 1
  %v80 = vsel %vm74, %v78, %v79
  %v83 = vsel %vm39, %v42, %v63
  %v85 = vsel %vm39, %v43, %v65
  %v88 = vsel %vm39, %v45, %v67
  %v90 = vsel %vm39, %v46, %v69
  %v91 = vshrl.u32 %v83, 16
  %v93 = vrot.slane %v91, 7
  %v94 = vshrl.u32 %v85, 16
  %v96 = vrot.slane %v94, 7
  %v97 = vshll.u32 %v85, 16
  %v99 = vor.u32 %v96, %v97
  %v100 = vsel %vm25, %v93, %v99
  %v102 = vshrl.u32 %v75, 16
  %v104 = vrot.slane %v102, 7
  %v106 = vshrl.u32 %v77, 16
  %v108 = vrot.slane %v106, 7
  %v109 = vshll.u32 %v77, 16
  %v111 = vor.u32 %v108, %v109
  %v112 = vsel %vm25, %v104, %v111
  %v113 = vshrl.u32 %v88, 16
  %v115 = vrot.slane %v113, 7
  %v116 = vshrl.u32 %v90, 16
  %v118 = vrot.slane %v116, 7
  %v119 = vshll.u32 %v90, 16
  %v121 = vor.u32 %v118, %v119
  %v122 = vsel %vm25, %v115, %v121
  %v124 = vshrl.u32 %v78, 16
  %v126 = vrot.slane %v124, 7
  %v128 = vshrl.u32 %v80, 16
  %v130 = vrot.slane %v128, 7
  %v131 = vshll.u32 %v80, 16
  %v133 = vor.u32 %v130, %v131
  %v134 = vsel %vm25, %v126, %v133
  %v137 = vld [vmem:[%s1] sm:$0xf]
  %v138 = vld [vmem:[%s1 + $0x4] sm:$0xf]
  %v139 = vld [vmem:[%s1 + $0x8] sm:$0xf]
  %v140 = vld [vmem:[%s1 + $0xc] sm:$0xf]
  %v141 = vld [vmem:[%s1 + $0x10] sm:$0xf]
  %v142 = vld [vmem:[%s1 + $0x14] sm:$0xf]
  %v143 = vld [vmem:[%s1 + $0x18] sm:$0xf]
  %v144 = vld [vmem:[%s1 + $0x1c] sm:$0xf]
  %v145 = vld [vmem:[%s1 + $0x20] sm:$0xf]
  %v146 = vld [vmem:[%s1 + $0x24] sm:$0xf]
  %v147 = vld [vmem:[%s1 + $0x28] sm:$0xf]
  %v148 = vld [vmem:[%s1 + $0x2c] sm:$0xf]
  %v149 = vld [vmem:[%s1 + $0x30] sm:$0xf]
  %v150 = vld [vmem:[%s1 + $0x34] sm:$0xf]
  %v151 = vld [vmem:[%s1 + $0x38] sm:$0xf]
  %v152 = vld [vmem:[%s1 + $0x3c] sm:$0xf]
  %v153 = vld [vmem:[%s1 + $0x40] sm:$0xf]
  %v154 = vld [vmem:[%s1 + $0x44] sm:$0xf]
  %v155 = vld [vmem:[%s1 + $0x48] sm:$0xf]
  %v156 = vld [vmem:[%s1 + $0x4c] sm:$0xf]
  %v157 = vld [vmem:[%s1 + $0x50] sm:$0xf]
  %v158 = vld [vmem:[%s1 + $0x54] sm:$0xf]
  %v159 = vld [vmem:[%s1 + $0x58] sm:$0xf]
  %v160 = vld [vmem:[%s1 + $0x5c] sm:$0xf]
  %v161 = vld [vmem:[%s2] sm:$0x1]
  %v163 = vlaneseq
  %v164 = vshrl.u32 %v163, 7
  %v165 = vsub.s32 0, %v164
  %v166 = vrot.slane %v161, %v165
  %v192 = vunpack.c.l.b16 %v137
  %v193 = vunpack.c.l.b16 %v138
  %v194 = vunpack.c.l.b16 %v139
  %v195 = vunpack.c.l.b16 %v140
  %v196 = vunpack.c.l.b16 %v141
  %v197 = vunpack.c.l.b16 %v142
  %v198 = vunpack.c.l.b16 %v143
  %v199 = vunpack.c.l.b16 %v144
  %v200 = vunpack.c.l.b16 %v145
  %v201 = vunpack.c.l.b16 %v146
  %v202 = vunpack.c.l.b16 %v147
  %v203 = vunpack.c.l.b16 %v148
  %v204 = vunpack.c.l.b16 %v149
  %v205 = vunpack.c.l.b16 %v150
  %v206 = vunpack.c.l.b16 %v151
  %v207 = vunpack.c.l.b16 %v152
  %v208 = vunpack.c.l.b16 %v153
  %v209 = vunpack.c.l.b16 %v154
  %v210 = vunpack.c.l.b16 %v155
  %v211 = vunpack.c.l.b16 %v156
  %v212 = vunpack.c.l.b16 %v157
  %v213 = vunpack.c.l.b16 %v158
  %v214 = vunpack.c.l.b16 %v159
  %v215 = vunpack.c.l.b16 %v160
  %v216 = vpack.c.b16 %v193, %v192
  %v217 = vpack.c.b16 %v195, %v194
  %v218 = vpack.c.b16 %v197, %v196
  %v219 = vpack.c.b16 %v199, %v198
  %v220 = vpack.c.b16 %v201, %v200
  %v221 = vpack.c.b16 %v203, %v202
  %v222 = vpack.c.b16 %v205, %v204
  %v223 = vpack.c.b16 %v207, %v206
  %v224 = vpack.c.b16 %v209, %v208
  %v225 = vpack.c.b16 %v211, %v210
  %v226 = vpack.c.b16 %v213, %v212
  %v227 = vpack.c.b16 %v215, %v214
  %v241 = vsel %vm39, %v112, 0
  %v244 = vsel %vm39, %v134, 0
  %246 = vmatprep.subr.bf16.mxu0 0
  %247 = vmatpush1.bf16.msra.mxu0 %v216
  %248 = vmatprep.subr.bf16.mxu0 0
  %249 = vmatpush1.bf16.msra.mxu0 %v217
  %250 = vmatprep.subr.bf16.mxu0 0
  %251 = vmatpush1.bf16.msra.mxu0 %v218
  %252 = vmatprep.subr.bf16.mxu0 0
  %253 = vmatpush1.bf16.msra.mxu0 %v219
  %254 = vmatprep.subr.bf16.mxu0 0
  %255 = vmatpush1.bf16.msra.mxu0 %v220
  %256 = vmatprep.subr.bf16.mxu0 0
  %257 = vmatpush1.bf16.msra.mxu0 %v221
  %258 = vmatprep.subr.bf16.mxu0 0
  %259 = vmatpush1.bf16.msra.mxu0 %v222
  %260 = vmatprep.subr.bf16.mxu0 0
  %261 = vmatpush1.bf16.msra.mxu0 %v223
  %262 = vmatprep.subr.bf16.mxu0 0
  %263 = vmatpush1.bf16.msra.mxu0 %v224
  %264 = vmatprep.subr.bf16.mxu0 0
  %265 = vmatpush1.bf16.msra.mxu0 %v225
  %266 = vmatprep.subr.bf16.mxu0 0
  %267 = vmatpush1.bf16.msra.mxu0 %v226
  %268 = vmatprep.subr.bf16.mxu0 0
  %269 = vmatpush1.bf16.msra.mxu0 %v227
  %270 = vmatprep.subr.bf16.mxu0 0
  %271 = vmatpush1.bf16.msra.mxu0 0
  %272 = vmatprep.subr.bf16.mxu0 0
  %273 = vmatpush1.bf16.msra.mxu0 0
  %274 = vmatprep.subr.bf16.mxu0 0
  %275 = vmatpush1.bf16.msra.mxu0 0
  %276 = vmatprep.subr.bf16.mxu0 0
  %277 = vmatpush1.bf16.msra.mxu0 0
  %278 = vmatprep.mubr.bf16.mxu0 %v241
  %279 = vmatmul.mubr.bf16.gmra.mrb[0].mxu0 %v100
  %v280 = vpop.f32.mrb[0].mxu0
  %v281 = vadd.f32 %v166, %v280
  %v282 = vpop.f32.mrb[0].mxu0
  %v283 = vpop.f32.mrb[0].mxu0
  %v284 = vadd.f32 %v166, %v283
  %v285 = vpop.f32.mrb[0].mxu0
  %286 = vmatprep.mubr.bf16.mxu0 %v244
  %287 = vmatmul.mubr.bf16.gmra.mrb[0].mxu0 %v122
  %v288 = vpop.f32.mrb[0].mxu0
  %v289 = vadd.f32 %v166, %v288
  %v290 = vpop.f32.mrb[0].mxu0
  %v291 = vpop.f32.mrb[0].mxu0
  %v292 = vadd.f32 %v166, %v291
  %v293 = vpop.f32.mrb[0].mxu0
  %294 = vdwg.mxu0
  %v295 = vmax.f32 %v281, 0.0
  %v296 = vmax.f32 %v284, 0.0
  %v297 = vmax.f32 %v289, 0.0
  %v298 = vmax.f32 %v292, 0.0
  %299 = vst [vmem:[%s3] sm:$0xff] %v295
  %300 = vst [vmem:[%s3 + $0x8] sm:$0xff] %v296
  %301 = vst [vmem:[%s3 + $0x10] sm:$0xff] %v297
  %302 = vst [vmem:[%s3 + $0x18] sm:$0xff] %v298
  // Predicated region
  $region14: #{conv_relu.1} parent=0 // pred_check
    _
  $region15: #{conv_relu.1} parent=0 // pred_check_branch
    %304 = sbr.rel (0) target = $region17
  $region16: #{conv_relu.1} parent=0 // pred_region
    _
  $region17: #{conv_relu.1} parent=0 // pred_fallthru
    _
  // Predicated region
  $region18: #{conv_relu.1} parent=0 // pred_check
    _
  $region19: #{conv_relu.1} parent=0 // pred_check_branch
    %306 = sbr.rel (0) target = $region21
  $region20: #{conv_relu.1} parent=0 // pred_region
    _
  $region21: #{conv_relu.1} parent=0 // pred_fallthru
    _

</llo_original>
